<compile_context>
chip_gen: v7x
topology: tpu7x:2x2x1
jax: 0.10.0
libtpu: 0.0.40
codegen_flags: <defaults>
</compile_context>

<pallas_src>
import functools

import jax
import jax.numpy as jnp
import numpy as np
from jax import lax
from jax.experimental import pallas as pl
from jax.experimental.pallas import tpu as pltpu

_LANE = 128
_EPS = 1e-5
# Conservative total-VMEM budget so the same tiling also fits v7x (64 MiB physical).
_VMEM_BUDGET = 40 * 1024 * 1024


# -----------------------------------------------------------------------------
# Fused kernel: conv (MXU matmul) + BatchNorm2d(affine=False, train) + PReLU
# Grid = (cout-block, phase, M-tile); phase 0 = conv + stats, phase 1 = normalize.
# -----------------------------------------------------------------------------
def _conv_bn_prelu_kernel(patch_ref, w_ref, alpha_ref, o_ref,
                          sum_sc, sq_sc, scale_sc, mean_sc, *opt,
                          inv_n, use_slab):
    phase = pl.program_id(1)
    m = pl.program_id(2)

    @pl.when(phase == 0)
    def _():
        @pl.when(m == 0)
        def _():
            sum_sc[...] = jnp.zeros_like(sum_sc)
            sq_sc[...] = jnp.zeros_like(sq_sc)

        # Conv as one MXU matmul over (cin*ks*ks); lane axis = flattened (b, oy, ox).
        y = jnp.dot(w_ref[...], patch_ref[...], preferred_element_type=jnp.float32)
        if use_slab:
            opt[0][m] = y                                     # keep pre-BN tile in VMEM
        sum_sc[...] += jnp.sum(y, axis=-1, keepdims=True)     # per-channel stats
        sq_sc[...] += jnp.sum(y * y, axis=-1, keepdims=True)
        # o_ref deliberately NOT written in phase 0 (its index_map is pinned there).

    @pl.when(phase == 1)
    def _():
        @pl.when(m == 0)
        def _():
            mean = sum_sc[...] * inv_n
            var = sq_sc[...] * inv_n - mean * mean            # biased variance
            scale_sc[...] = lax.rsqrt(var + _EPS)
            mean_sc[...] = mean

        if use_slab:
            y = opt[0][m]
        else:
            y = jnp.dot(w_ref[...], patch_ref[...], preferred_element_type=jnp.float32)
        yhat = (y - mean_sc[...]) * scale_sc[...]
        a = alpha_ref[0, 0]                                   # shared PReLU slope (SMEM)
        o_ref[...] = jnp.where(yhat > 0.0, yhat, a * yhat)


def _pick_tile_co(cout):
    if cout % 8 != 0:
        return cout
    for cand in (128, 64, 32, 16, 8):
        if cand <= cout and cout % cand == 0:
            return cand
    return cout


def conv_block(x, w, b, alpha, *, stride, padding):
    """x: (B, cin, H, W); w: (cout, cin, ks, ks) [torch layout]; b: (cout,); alpha: (1,)."""
    # Conv bias is mathematically cancelled by BatchNorm (training stats, affine=False).
    del b
    bsz, cin, h, wdt = x.shape
    cout, cin_w, ks, _ = w.shape
    assert cin_w == cin
    oh = (h + 2 * padding - ks) // stride + 1
    ow = (wdt + 2 * padding - ks) // stride + 1
    m_total = bsz * oh * ow
    k_total = cin * ks * ks

    # --- JAX glue (pure data movement): zero-pad + im2col into (K, M), M lane-dense.
    xp = jnp.pad(x, ((0, 0), (0, 0), (padding, padding), (padding, padding)))
    rows = []
    for kh in range(ks):
        cols = []
        for kw in range(ks):
            cols.append(xp[:, :,
                           kh:kh + (oh - 1) * stride + 1:stride,
                           kw:kw + (ow - 1) * stride + 1:stride])   # (B, cin, OH, OW)
        rows.append(jnp.stack(cols, axis=2))                        # (B, cin, ks_w, OH, OW)
    pat = jnp.stack(rows, axis=2)                                   # (B, cin, ks_h, ks_w, OH, OW)
    patches = jnp.transpose(pat, (1, 2, 3, 0, 4, 5)).reshape(k_total, m_total)

    # Pad M to a multiple of 128: unmasked lane-dense stores + active pipelining.
    # Zero columns give y == 0 (no bias), so batch statistics stay exact with inv_n = 1/M.
    m_padded = ((m_total + _LANE - 1) // _LANE) * _LANE
    if m_padded != m_total:
        patches = jnp.pad(patches, ((0, 0), (0, m_padded - m_total)))

    w_flat = w.reshape(cout, k_total)       # row-major (cin, kh, kw) matches patches
    alpha_s = alpha.reshape(1, 1)

    tile_co = _pick_tile_co(cout)
    n_co = cout // tile_co

    def vmem_bytes(tm, with_slab):
        patch_buf = 2 * k_total * tm * 4            # double-buffered patch tile
        w_buf = 2 * tile_co * k_total * 4           # weight buffers
        out_buf = 2 * tile_co * tm * 4              # double-buffered output tile
        stats = 4 * tile_co * _LANE * 4             # 4 small scratch vectors (layout-padded)
        slab_buf = tile_co * m_padded * 4 if with_slab else 0
        return patch_buf + w_buf + out_buf + stats + slab_buf

    tile_m = _LANE
    for cand in (1024, 512, 256, 128):
        if m_padded % cand == 0 and vmem_bytes(cand, False) <= _VMEM_BUDGET:
            tile_m = cand
            break
    n_mt = m_padded // tile_m

    # Slab mode (patches streamed exactly once) when the pre-BN output fits the VMEM
    # budget; otherwise recompute the matmul in phase 1 (VMEM bounded by the tile).
    use_slab = vmem_bytes(tile_m, True) <= _VMEM_BUDGET

    if use_slab:
        patch_idx = lambda co, p, m: (0, m * (1 - p))   # pinned during phase 1: no restream
    else:
        patch_idx = lambda co, p, m: (0, m)             # re-streamed, matmul recomputed

    scratch = [
        pltpu.VMEM((tile_co, 1), jnp.float32),   # running per-channel sum
        pltpu.VMEM((tile_co, 1), jnp.float32),   # running per-channel sum of squares
        pltpu.VMEM((tile_co, 1), jnp.float32),   # rsqrt(var + eps)
        pltpu.VMEM((tile_co, 1), jnp.float32),   # mean
    ]
    if use_slab:
        scratch.append(pltpu.VMEM((n_mt, tile_co, tile_m), jnp.float32))   # pre-BN slab

    kernel = functools.partial(_conv_bn_prelu_kernel,
                               inv_n=1.0 / m_total, use_slab=use_slab)

    passes = 1 if use_slab else 2
    vmem_limit = int(min(64 * 1024 * 1024, vmem_bytes(tile_m, use_slab) + (8 << 20)))

    y = pl.pallas_call(
        kernel,
        out_shape=jax.ShapeDtypeStruct((cout, m_padded), jnp.float32),
        grid_spec=pltpu.PrefetchScalarGridSpec(
            num_scalar_prefetch=0,
            grid=(n_co, 2, n_mt),                                 # (cout-block, phase, M-tile)
            in_specs=[
                pl.BlockSpec((k_total, tile_m), patch_idx),                   # patches
                pl.BlockSpec((tile_co, k_total), lambda co, p, m: (co, 0)),   # weights
                pl.BlockSpec(memory_space=pltpu.MemorySpace.SMEM),            # prelu slope
            ],
            # Output pinned during phase 0 (never written there) -> no pre-BN writeback;
            # phase 1 fully writes every block (including 128-lane padding).
            out_specs=pl.BlockSpec((tile_co, tile_m), lambda co, p, m: (co, m * p)),
            scratch_shapes=scratch,
        ),
        compiler_params=pltpu.CompilerParams(
            # cout blocks are independent (per-channel BN stats) -> parallel across cores;
            # the phase and M axes carry the batch-stats reduction -> arbitrary.
            dimension_semantics=("parallel", "arbitrary", "arbitrary"),
            vmem_limit_bytes=vmem_limit),
        cost_estimate=pl.CostEstimate(
            flops=2 * cout * k_total * m_padded * passes,
            transcendentals=0,
            bytes_accessed=4 * (k_total * m_padded * passes
                                + cout * k_total + cout * m_padded)),
    )(patches, w_flat, alpha_s)

    # (cout, M_padded) -> drop padding -> NCHW; pure data movement outside the kernel.
    y = y[:, :m_total]
    return jnp.transpose(y.reshape(cout, bsz, oh, ow), (1, 0, 2, 3))


conv_block_jit = jax.jit(conv_block, static_argnames=("stride", "padding"))


# -----------------------------------------------------------------------------
# Pure-JAX reference (Conv2d(+bias) -> BN(train, affine=False) -> PReLU).
# -----------------------------------------------------------------------------
def reference(x, w, b, alpha, *, stride, padding):
    y = lax.conv_general_dilated(
        x, w, window_strides=(stride, stride),
        padding=[(padding, padding), (padding, padding)],
        dimension_numbers=("NCHW", "OIHW", "NCHW"),
        precision=lax.Precision.HIGHEST)
    y = y + b.reshape(1, -1, 1, 1)
    mean = y.mean(axis=(0, 2, 3), keepdims=True)
    var = ((y - mean) ** 2).mean(axis=(0, 2, 3), keepdims=True)
    yhat = (y - mean) * lax.rsqrt(var + _EPS)
    return jnp.where(yhat > 0, yhat, alpha[0] * yhat)


if __name__ == "__main__":
    key = jax.random.PRNGKey(0)
    kx, kw1, kb1, kw2, kb2, kx3, kw3, kb3 = jax.random.split(key, 8)

    B, cin, H, W = 2, 4, 16, 16
    x = jax.random.normal(kx, (B, cin, H, W), jnp.float32)
    alpha = jnp.array([0.25], jnp.float32)          # nn.PReLU() default init

    # Config 1: same-resolution ConvBlock (ks=3, stride=1, pad=1)
    cout = 8
    w1 = 0.1 * jax.random.normal(kw1, (cout, cin, 3, 3), jnp.float32)
    b1 = 0.1 * jax.random.normal(kb1, (cout,), jnp.float32)
    out1 = jax.block_until_ready(conv_block_jit(x, w1, b1, alpha, stride=1, padding=1))
    assert out1.shape == (B, cout, 16, 16)
    ref1 = reference(x, w1, b1, alpha, stride=1, padding=1)
    np.testing.assert_allclose(np.asarray(out1), np.asarray(ref1), rtol=1e-3, atol=1e-3)

    # Config 2: downsampling ConvBlock (ks=4, stride=2, pad=1)
    w2 = 0.1 * jax.random.normal(kw2, (cout, cin, 4, 4), jnp.float32)
    b2 = 0.1 * jax.random.normal(kb2, (cout,), jnp.float32)
    out2 = jax.block_until_ready(conv_block_jit(x, w2, b2, alpha, stride=2, padding=1))
    assert out2.shape == (B, cout, 8, 8)
    ref2 = reference(x, w2, b2, alpha, stride=2, padding=1)
    np.testing.assert_allclose(np.asarray(out2), np.asarray(ref2), rtol=1e-3, atol=1e-3)

    # Config 3: odd spatial size (M not a multiple of 128 -> exercises lane padding)
    x3 = jax.random.normal(kx3, (1, 3, 15, 15), jnp.float32)
    w3 = 0.1 * jax.random.normal(kw3, (16, 3, 3, 3), jnp.float32)
    b3 = 0.1 * jax.random.normal(kb3, (16,), jnp.float32)
    out3 = jax.block_until_ready(conv_block_jit(x3, w3, b3, alpha, stride=2, padding=1))
    assert out3.shape == (1, 16, 8, 8)
    ref3 = reference(x3, w3, b3, alpha, stride=2, padding=1)
    np.testing.assert_allclose(np.asarray(out3), np.asarray(ref3), rtol=1e-3, atol=1e-3)

    print("KERNEL_OK")
</pallas_src>

<mosaic_0001>
module attributes {stable_mosaic.version = 11 : i64} {
  func.func @_conv_bn_prelu_kernel(%arg0: i32, %arg1: i32, %arg2: i32, %arg3: memref<36x512xf32, #tpu.memory_space<vmem>>, %arg4: memref<8x36xf32, #tpu.memory_space<vmem>>, %arg5: memref<1x1xf32, #tpu.memory_space<smem>>, %arg6: memref<8x512xf32, #tpu.memory_space<vmem>>, %arg7: memref<8x1xf32, #tpu.memory_space<vmem>>, %arg8: memref<8x1xf32, #tpu.memory_space<vmem>>, %arg9: memref<8x1xf32, #tpu.memory_space<vmem>>, %arg10: memref<8x1xf32, #tpu.memory_space<vmem>>, %arg11: memref<1x8x512xf32, #tpu.memory_space<vmem>>) attributes {dimension_semantics = [#tpu.dimension_semantics<parallel>, #tpu.dimension_semantics<arbitrary>, #tpu.dimension_semantics<arbitrary>], iteration_bounds = array<i64: 1, 2, 1>, scalar_prefetch = 0 : i64, scratch_operands = 5 : i64, tpu.core_type = #tpu.core_type<tc>, window_params = [{transform_indices = @transform_0, window_bounds = array<i64: 36, 512>}, {transform_indices = @transform_1, window_bounds = array<i64: 8, 36>}, {transform_indices = @transform_2, window_bounds = array<i64: 1, 1>}, {transform_indices = @transform_3, window_bounds = array<i64: 8, 512>}]} {
    %c0_i32 = arith.constant 0 : i32
    %0 = arith.cmpi eq, %arg1, %c0_i32 : i32
    %1 = arith.extui %0 : i1 to i32
    %c0_i32_0 = arith.constant 0 : i32
    %2 = arith.cmpi ne, %1, %c0_i32_0 : i32
    scf.if %2 {
      %c0_i32_2 = arith.constant 0 : i32
      %6 = arith.cmpi eq, %arg2, %c0_i32_2 : i32
      %7 = arith.extui %6 : i1 to i32
      %c0_i32_3 = arith.constant 0 : i32
      %8 = arith.cmpi ne, %7, %c0_i32_3 : i32
      scf.if %8 {
        %cst_19 = arith.constant 0.000000e+00 : f32
        %27 = vector.broadcast %cst_19 : f32 to vector<8x1xf32>
        %c0_20 = arith.constant 0 : index
        %c0_21 = arith.constant 0 : index
        %28 = vector.load %arg7[%c0_20, %c0_21] : memref<8x1xf32, #tpu.memory_space<vmem>>, vector<8x1xf32>
        tpu.vector_store %arg7[%c0_20, %c0_21], %27 {strides = array<i32>} : memref<8x1xf32, #tpu.memory_space<vmem>>, vector<8x1xf32>,
        %cst_22 = arith.constant 0.000000e+00 : f32
        %29 = vector.broadcast %cst_22 : f32 to vector<8x1xf32>
        %c0_23 = arith.constant 0 : index
        %c0_24 = arith.constant 0 : index
        %30 = vector.load %arg8[%c0_23, %c0_24] : memref<8x1xf32, #tpu.memory_space<vmem>>, vector<8x1xf32>
        tpu.vector_store %arg8[%c0_23, %c0_24], %29 {strides = array<i32>} : memref<8x1xf32, #tpu.memory_space<vmem>>, vector<8x1xf32>,
      } else {
      }
      %c0 = arith.constant 0 : index
      %c0_4 = arith.constant 0 : index
      %9 = vector.load %arg4[%c0, %c0_4] : memref<8x36xf32, #tpu.memory_space<vmem>>, vector<8x36xf32>
      %c0_5 = arith.constant 0 : index
      %c0_6 = arith.constant 0 : index
      %10 = vector.load %arg3[%c0_5, %c0_6] : memref<36x512xf32, #tpu.memory_space<vmem>>, vector<36x512xf32>
      %cst = arith.constant dense<0.000000e+00> : vector<8x512xf32>
      %11 = tpu.matmul %9, %10, %cst {dimension_numbers = #tpu.dot_dimension_numbers<[1], [0], [0], [1], [0, 0, 1, 1], [], []>} : vector<8x36xf32>, vector<36x512xf32>, vector<8x512xf32> -> vector<8x512xf32>
      %12 = arith.index_cast %arg2 : i32 to index
      %c0_7 = arith.constant 0 : index
      %c0_8 = arith.constant 0 : index
      %13 = vector.load %arg11[%12, %c0_7, %c0_8] : memref<1x8x512xf32, #tpu.memory_space<vmem>>, vector<1x8x512xf32>
      %14 = vector.shape_cast %13 : vector<1x8x512xf32> to vector<8x512xf32>
      %15 = vector.shape_cast %11 : vector<8x512xf32> to vector<1x8x512xf32>
      tpu.vector_store %arg11[%12, %c0_7, %c0_8], %15 {strides = array<i32>} : memref<1x8x512xf32, #tpu.memory_space<vmem>>, vector<1x8x512xf32>,
      %c0_9 = arith.constant 0 : index
      %c0_10 = arith.constant 0 : index
      %16 = vector.load %arg7[%c0_9, %c0_10] : memref<8x1xf32, #tpu.memory_space<vmem>>, vector<8x1xf32>
      %cst_11 = arith.constant dense<0.000000e+00> : vector<8xf32>
      %17 = vector.multi_reduction <add>, %11, %cst_11 [1] : vector<8x512xf32> to vector<8xf32>
      %18 = vector.shape_cast %17 : vector<8xf32> to vector<8x1xf32>
      %19 = arith.addf %16, %18 : vector<8x1xf32>
      %c0_12 = arith.constant 0 : index
      %c0_13 = arith.constant 0 : index
      %20 = vector.load %arg7[%c0_12, %c0_13] : memref<8x1xf32, #tpu.memory_space<vmem>>, vector<8x1xf32>
      tpu.vector_store %arg7[%c0_12, %c0_13], %19 {strides = array<i32>} : memref<8x1xf32, #tpu.memory_space<vmem>>, vector<8x1xf32>,
      %c0_14 = arith.constant 0 : index
      %c0_15 = arith.constant 0 : index
      %21 = vector.load %arg8[%c0_14, %c0_15] : memref<8x1xf32, #tpu.memory_space<vmem>>, vector<8x1xf32>
      %22 = arith.mulf %11, %11 : vector<8x512xf32>
      %cst_16 = arith.constant dense<0.000000e+00> : vector<8xf32>
      %23 = vector.multi_reduction <add>, %22, %cst_16 [1] : vector<8x512xf32> to vector<8xf32>
      %24 = vector.shape_cast %23 : vector<8xf32> to vector<8x1xf32>
      %25 = arith.addf %21, %24 : vector<8x1xf32>
      %c0_17 = arith.constant 0 : index
      %c0_18 = arith.constant 0 : index
      %26 = vector.load %arg8[%c0_17, %c0_18] : memref<8x1xf32, #tpu.memory_space<vmem>>, vector<8x1xf32>
      tpu.vector_store %arg8[%c0_17, %c0_18], %25 {strides = array<i32>} : memref<8x1xf32, #tpu.memory_space<vmem>>, vector<8x1xf32>,
    } else {
    }
    %c1_i32 = arith.constant 1 : i32
    %3 = arith.cmpi eq, %arg1, %c1_i32 : i32
    %4 = arith.extui %3 : i1 to i32
    %c0_i32_1 = arith.constant 0 : i32
    %5 = arith.cmpi ne, %4, %c0_i32_1 : i32
    scf.if %5 {
      %c0_i32_2 = arith.constant 0 : i32
      %6 = arith.cmpi eq, %arg2, %c0_i32_2 : i32
      %7 = arith.extui %6 : i1 to i32
      %c0_i32_3 = arith.constant 0 : i32
      %8 = arith.cmpi ne, %7, %c0_i32_3 : i32
      scf.if %8 {
        %c0_13 = arith.constant 0 : index
        %c0_14 = arith.constant 0 : index
        %25 = vector.load %arg7[%c0_13, %c0_14] : memref<8x1xf32, #tpu.memory_space<vmem>>, vector<8x1xf32>
        %cst_15 = arith.constant 0.001953125 : f32
        %26 = vector.broadcast %cst_15 : f32 to vector<8x1xf32>
        %27 = arith.mulf %25, %26 : vector<8x1xf32>
        %c0_16 = arith.constant 0 : index
        %c0_17 = arith.constant 0 : index
        %28 = vector.load %arg8[%c0_16, %c0_17] : memref<8x1xf32, #tpu.memory_space<vmem>>, vector<8x1xf32>
        %cst_18 = arith.constant 0.001953125 : f32
        %29 = vector.broadcast %cst_18 : f32 to vector<8x1xf32>
        %30 = arith.mulf %28, %29 : vector<8x1xf32>
        %31 = arith.mulf %27, %27 : vector<8x1xf32>
        %32 = arith.subf %30, %31 : vector<8x1xf32>
        %cst_19 = arith.constant 9.99999974E-6 : f32
        %33 = vector.broadcast %cst_19 : f32 to vector<8x1xf32>
        %34 = arith.addf %32, %33 : vector<8x1xf32>
        %35 = math.rsqrt %34 : vector<8x1xf32>
        %c0_20 = arith.constant 0 : index
        %c0_21 = arith.constant 0 : index
        %36 = vector.load %arg9[%c0_20, %c0_21] : memref<8x1xf32, #tpu.memory_space<vmem>>, vector<8x1xf32>
        tpu.vector_store %arg9[%c0_20, %c0_21], %35 {strides = array<i32>} : memref<8x1xf32, #tpu.memory_space<vmem>>, vector<8x1xf32>,
        %c0_22 = arith.constant 0 : index
        %c0_23 = arith.constant 0 : index
        %37 = vector.load %arg10[%c0_22, %c0_23] : memref<8x1xf32, #tpu.memory_space<vmem>>, vector<8x1xf32>
        tpu.vector_store %arg10[%c0_22, %c0_23], %27 {strides = array<i32>} : memref<8x1xf32, #tpu.memory_space<vmem>>, vector<8x1xf32>,
      } else {
      }
      %9 = arith.index_cast %arg2 : i32 to index
      %c0 = arith.constant 0 : index
      %c0_4 = arith.constant 0 : index
      %10 = vector.load %arg11[%9, %c0, %c0_4] : memref<1x8x512xf32, #tpu.memory_space<vmem>>, vector<1x8x512xf32>
      %11 = vector.shape_cast %10 : vector<1x8x512xf32> to vector<8x512xf32>
      %c0_5 = arith.constant 0 : index
      %c0_6 = arith.constant 0 : index
      %12 = vector.load %arg10[%c0_5, %c0_6] : memref<8x1xf32, #tpu.memory_space<vmem>>, vector<8x1xf32>
      %13 = vector.broadcast %12 : vector<8x1xf32> to vector<8x512xf32>
      %14 = arith.subf %11, %13 : vector<8x512xf32>
      %c0_7 = arith.constant 0 : index
      %c0_8 = arith.constant 0 : index
      %15 = vector.load %arg9[%c0_7, %c0_8] : memref<8x1xf32, #tpu.memory_space<vmem>>, vector<8x1xf32>
      %16 = vector.broadcast %15 : vector<8x1xf32> to vector<8x512xf32>
      %17 = arith.mulf %14, %16 : vector<8x512xf32>
      %c0_9 = arith.constant 0 : index
      %c0_10 = arith.constant 0 : index
      %18 = memref.load %arg5[%c0_9, %c0_10] : memref<1x1xf32, #tpu.memory_space<smem>>
      %cst = arith.constant 0.000000e+00 : f32
      %19 = vector.broadcast %cst : f32 to vector<8x512xf32>
      %20 = arith.cmpf ogt, %17, %19 : vector<8x512xf32>
      %21 = vector.broadcast %18 : f32 to vector<8x512xf32>
      %22 = arith.mulf %21, %17 : vector<8x512xf32>
      %23 = arith.select %20, %17, %22 : vector<8x512xi1>, vector<8x512xf32>
      %c0_11 = arith.constant 0 : index
      %c0_12 = arith.constant 0 : index
      %24 = vector.load %arg6[%c0_11, %c0_12] : memref<8x512xf32, #tpu.memory_space<vmem>>, vector<8x512xf32>
      tpu.vector_store %arg6[%c0_11, %c0_12], %23 {strides = array<i32>} : memref<8x512xf32, #tpu.memory_space<vmem>>, vector<8x512xf32>,
    } else {
    }
    return
  }
  func.func @transform_0(%arg0: i32, %arg1: i32, %arg2: i32) -> (i32, i32) {
    %c1_i32 = arith.constant 1 : i32
    %0 = arith.subi %c1_i32, %arg1 : i32
    %1 = arith.muli %arg2, %0 : i32
    %c0_i32 = arith.constant 0 : i32
    %c0_i32_0 = arith.constant 0 : i32
    return %c0_i32, %1 : i32, i32
  }
  func.func @transform_1(%arg0: i32, %arg1: i32, %arg2: i32) -> (i32, i32) {
    %c0_i32 = arith.constant 0 : i32
    %c0_i32_0 = arith.constant 0 : i32
    return %arg0, %c0_i32 : i32, i32
  }
  func.func @transform_2(%arg0: i32, %arg1: i32, %arg2: i32) -> (i32, i32) {
    %c0_i32 = arith.constant 0 : i32
    %c0_i32_0 = arith.constant 0 : i32
    %c0_i32_1 = arith.constant 0 : i32
    return %c0_i32, %c0_i32_0 : i32, i32
  }
  func.func @transform_3(%arg0: i32, %arg1: i32, %arg2: i32) -> (i32, i32) {
    %0 = arith.muli %arg2, %arg1 : i32
    %c0_i32 = arith.constant 0 : i32
    return %arg0, %0 : i32, i32
  }
}

</mosaic_0001>

<llo_original>
// kernel: conv_block.1
$region0: #{conv_block.1}
  #allocation0 [shape = 'u32[]', space=smem, size = 0x4, offset = 0x4, fixed_abs, tag = 'smem constant byte address 0x4 - core index']
  #allocation1 [shape = 'u32[144,128]{1,0:T(1,128)}', space=vmem, size = 0x12000, scoped, tag = 'internal scratch']
  #allocation2 [shape = 'f32[8,1]{1,0:T(8,128)}', space=vmem, size = 0x1000, scoped, tag = 'scratch operand']
  #allocation3 [shape = 'f32[8,1]{1,0:T(8,128)}', space=vmem, size = 0x1000, scoped, tag = 'scratch operand']
  #allocation4 [shape = 'f32[8,1]{1,0:T(8,128)}', space=vmem, size = 0x1000, scoped, tag = 'scratch operand']
  #allocation5 [shape = 'f32[8,1]{1,0:T(8,128)}', space=vmem, size = 0x1000, scoped, tag = 'scratch operand']
  #allocation6 [shape = 'f32[1,8,512]{2,1,0:T(8,128)}', space=vmem, size = 0x4000, scoped, tag = 'scratch operand']
  #allocation7 [shape = 'f32[1,1]{1,0:T(1,128)S(6)}', space=smem, size = 0x200, scoped, tag = 'scoped memory for conv_block.1']
  %s0 = inlined_call_operand.vmem [shape: f32[36,512], index: 0, kind: input, shape index: {}]
  %s1 = inlined_call_operand.vmem [shape: f32[8,36], index: 1, kind: input, shape index: {}]
  %s2 = inlined_call_operand.<no memory space> [shape: f32[1,1], index: 2, kind: input, shape index: {}]
  %s3 = inlined_call_operand.vmem [shape: f32[8,512], index: 3, kind: output, shape index: {}]
  %s4 = sld [smem:[#allocation0]]
  $region61: #{conv_block.1} parent=0
    _
  %s6 = ssub.s32 1, %s4
  %s7 = scalar_select 0, %s6, %s4
  %8 = sst [smem:[#allocation7]] %s2
  loop: start=0, step=1, limit=4
  $region2: #{conv_block.1} parent=0 // loop_pre_header
    _
  $region3: #{conv_block.1} parent=0 // loop_header
    %s10 = sphi 0, %s14
    %p11 = scmp.ge.s32.totalorder %s10, 4
    %s17 = sphi 0, %s36
    %s18 = sphi 0, %s32
    %s19 = sphi 0, %s28
    %s20 = sphi 0, %s17
    %s21 = sphi 0, %s18
    %s22 = sphi 0, %s19
    %s23 = sphi 0, %s20
    %s24 = sphi 0, %s21
    %s25 = sphi 0, %s22
    %s43 = sphi 0, %s45
    %s46 = sphi 0, %s43
    %s47 = sphi 0, %s46
    %s63 = sphi 0, %s47
    %s69 = sphi 0, %s71
    %s72 = sphi 0, %s69
    %s73 = sphi 0, %s72
    %s89 = sphi 0, %s73
    %s93 = sphi 0, %s93
    %s95 = sphi 0, %s93
    %s96 = sphi 0, %s95
    %s110 = sphi 0, %s96
    %s120 = sphi 0, %s122
    %s123 = sphi 0, %s120
    %s124 = sphi 0, %s123
    %s140 = sphi 0, %s124
  $region4: #{conv_block.1} parent=0 // loop_header_branch
    %13 = sbr.rel (%p11) target = $region8
  $region5: #{conv_block.1} parent=0 // loop_body
    %s15 = ssub.s32 %s10, 1
    %s16 = ssub.s32 %s10, 2
    %s26 = sadd.s32 1, %s19
    %p27 = scmp.ge.s32.totalorder %s26, 1
    %s28 = scalar_select %p27, 0, %s26
    %s29 = sadd.s32 1, %s18
    %s30 = scalar_select %p27, %s29, %s18
    %p31 = scmp.ge.s32.totalorder %s30, 2
    %s32 = scalar_select %p31, 0, %s30
    %s33 = sadd.s32 1, %s17
    %s34 = scalar_select %p31, %s33, %s17
    %p35 = scmp.ge.s32.totalorder %s34, 1
    %s36 = scalar_select %p35, 0, %s34
    %s37 = ssub.s32 1, %s18
    %s38 = smul.u32 %s19, %s37
    %s39 = ssub.s32 1, %s32
    %s40 = smul.u32 %s28, %s39
    %s41 = ssub.s32 %s38, %s40
    %p42 = scmp.eq.s32.totalorder %s41, 0
    %s44 = sadd.s32 %s43, 1
    %s45 = scalar_select %p42, %s43, %s44
    %p48 = pneg %p42
    %p49 = scmp.eq.s32.totalorder %s10, 1
    %p50 = por %p48, %p49
    %p51 = scmp.ne.s32.totalorder %s43, %s46
    %p52 = scmp.eq.s32.totalorder %s10, 0
    %p53 = por %p51, %p52
    %p54 = scmp.ne.s32.totalorder %s43, %s46
    %p55 = scmp.eq.s32.totalorder %s15, 1
    %p56 = por %p54, %p55
    %p57 = scmp.ne.s32.totalorder %s46, %s47
    %p58 = scmp.eq.s32.totalorder %s15, 0
    %p59 = por %p57, %p58
    %p60 = scmp.ne.s32.totalorder %s46, %s47
    %p61 = scmp.eq.s32.totalorder %s16, 1
    %p62 = por %p60, %p61
    %p64 = scmp.ne.s32.totalorder %s47, %s63
    %p65 = scmp.eq.s32.totalorder %s16, 0
    %p66 = por %p64, %p65
    %s67 = ssub.s32 %s17, %s36
    %p68 = scmp.eq.s32.totalorder %s67, 0
    %s70 = sadd.s32 %s69, 1
    %s71 = scalar_select %p68, %s69, %s70
    %p74 = pneg %p68
    %p75 = scmp.eq.s32.totalorder %s10, 1
    %p76 = por %p74, %p75
    %p77 = scmp.ne.s32.totalorder %s69, %s72
    %p78 = scmp.eq.s32.totalorder %s10, 0
    %p79 = por %p77, %p78
    %p80 = scmp.ne.s32.totalorder %s69, %s72
    %p81 = scmp.eq.s32.totalorder %s15, 1
    %p82 = por %p80, %p81
    %p83 = scmp.ne.s32.totalorder %s72, %s73
    %p84 = scmp.eq.s32.totalorder %s15, 0
    %p85 = por %p83, %p84
    %p86 = scmp.ne.s32.totalorder %s72, %s73
    %p87 = scmp.eq.s32.totalorder %s16, 1
    %p88 = por %p86, %p87
    %p90 = scmp.ne.s32.totalorder %s73, %s89
    %p91 = scmp.eq.s32.totalorder %s16, 0
    %p92 = por %p90, %p91
    %s94 = sadd.s32 %s93, 1
    %p97 = scmp.eq.s32.totalorder %s10, 1
    %p98 = scmp.ne.s32.totalorder %s93, %s95
    %p99 = scmp.eq.s32.totalorder %s10, 0
    %p100 = por %p98, %p99
    %p101 = scmp.ne.s32.totalorder %s93, %s95
    %p102 = scmp.eq.s32.totalorder %s15, 1
    %p103 = por %p101, %p102
    %p104 = scmp.ne.s32.totalorder %s95, %s96
    %p105 = scmp.eq.s32.totalorder %s15, 0
    %p106 = por %p104, %p105
    %p107 = scmp.ne.s32.totalorder %s95, %s96
    %p108 = scmp.eq.s32.totalorder %s16, 1
    %p109 = por %p107, %p108
    %p111 = scmp.ne.s32.totalorder %s96, %s110
    %p112 = scmp.eq.s32.totalorder %s16, 0
    %p113 = por %p111, %p112
    %s114 = smul.u32 %s19, %s18
    %s115 = smul.u32 %s28, %s32
    %s116 = ssub.s32 %s17, %s36
    %s117 = ssub.s32 %s114, %s115
    %s118 = sor.u32 %s116, %s117
    %p119 = scmp.eq.s32.totalorder %s118, 0
    %s121 = sadd.s32 %s120, 1
    %s122 = scalar_select %p119, %s120, %s121
    %p125 = pneg %p119
    %p126 = scmp.eq.s32.totalorder %s10, 1
    %p127 = por %p125, %p126
    %p128 = scmp.ne.s32.totalorder %s120, %s123
    %p129 = scmp.eq.s32.totalorder %s10, 0
    %p130 = por %p128, %p129
    %p131 = scmp.ne.s32.totalorder %s120, %s123
    %p132 = scmp.eq.s32.totalorder %s15, 1
    %p133 = por %p131, %p132
    %p134 = scmp.ne.s32.totalorder %s123, %s124
    %p135 = scmp.eq.s32.totalorder %s15, 0
    %p136 = por %p134, %p135
    %p137 = scmp.ne.s32.totalorder %s123, %s124
    %p138 = scmp.eq.s32.totalorder %s16, 1
    %p139 = por %p137, %p138
    %p141 = scmp.ne.s32.totalorder %s124, %s140
    %p142 = scmp.eq.s32.totalorder %s16, 0
    %p143 = por %p141, %p142
    %p144 = scmp.le.s32.totalorder 1, %s10
    %p145 = scmp.lt.s32.totalorder %s10, 3
    %p146 = pnand %p144, %p145
    %p147 = pneg %p146
    // Predicated region
    $region9: #{conv_block.1} parent=5 // pred_check
      _
    $region10: #{conv_block.1} parent=5 // pred_check_branch
      %149 = sbr.rel (%p146) target = $region12
    $region11: #{conv_block.1} parent=5 // pred_region
      %s150 = ssub.s32 %s10, 1
      // Predicated region
      $region13: #{conv_block.1} parent=11 // pred_check
        %p151 = pneg %p85
      $region14: #{conv_block.1} parent=11 // pred_check_branch
        %153 = sbr.rel (%p151) target = $region16
      $region15: #{conv_block.1} parent=11 // pred_region
        %p154 = scmp.lt.s32.totalorder %s20, 0
        %s155 = scalar_select %p154, %s20, 0
        %s156 = smul.addr %s155, 8
        %s157 = scalar_lea.vmem %s1, %s156
      $region16: #{conv_block.1} parent=11 // pred_fallthru
        _
      // Predicated region
      $region17: #{conv_block.1} parent=11 // pred_check
        %p158 = pneg %p106
      $region18: #{conv_block.1} parent=11 // pred_check_branch
        %160 = sbr.rel (%p158) target = $region20
      $region19: #{conv_block.1} parent=11 // pred_region
        _
      $region20: #{conv_block.1} parent=11 // pred_fallthru
        _
    $region12: #{conv_block.1} parent=5 // pred_fallthru
      _
    %p161 = scmp.lt.s32.totalorder %s10, 2
    // Predicated region
    $region21: #{conv_block.1} parent=5 // pred_check
      %p162 = pneg %p161
    $region22: #{conv_block.1} parent=5 // pred_check_branch
      %164 = sbr.rel (%p162) target = $region24
    $region23: #{conv_block.1} parent=5 // pred_region
      // Predicated region
      $region25: #{conv_block.1} parent=23 // pred_check
        %p165 = pneg %p53
      $region26: #{conv_block.1} parent=23 // pred_check_branch
        %167 = sbr.rel (%p165) target = $region28
      $region27: #{conv_block.1} parent=23 // pred_region
        %s168 = ssub.s32 1, %s18
        %s169 = smul.u32 %s19, %s168
        %s170 = smul.u32 4, %s169
        %p171 = scmp.lt.s32.totalorder %s170, 3
        %s172 = scalar_select %p171, %s170, 3
        %s173 = smul.addr %s172, 8
        %s174 = scalar_lea.vmem %s0, %s173
        %s175 = ssub.s32 1, %s18
        %s176 = smul.u32 %s19, %s175
        %s177 = smul.u32 4, %s176
      $region28: #{conv_block.1} parent=23 // pred_fallthru
        _
    $region24: #{conv_block.1} parent=5 // pred_fallthru
      _
    %p178 = scmp.le.s32.totalorder 1, %s10
    %p179 = scmp.lt.s32.totalorder %s10, 3
    %p180 = pnand %p178, %p179
    %p181 = pneg %p180
    // Predicated region
    $region29: #{conv_block.1} parent=5 // pred_check
      _
    $region30: #{conv_block.1} parent=5 // pred_check_branch
      %183 = sbr.rel (%p180) target = $region32
    $region31: #{conv_block.1} parent=5 // pred_region
      %s184 = ssub.s32 %s10, 1
      %s185 = ssub.s32 1, %s21
      %s186 = smul.u32 %s22, %s185
      %s187 = smul.u32 4, %s186
      %p188 = scmp.lt.s32.totalorder %s187, 3
      %s189 = scalar_select %p188, %s187, 3
      %s190 = smul.addr %s189, 8
      %s191 = scalar_lea.vmem %s0, %s190
      %p192 = pneg %p59
      %p193 = pneg %p56
      %p194 = scmp.lt.s32.totalorder %s20, 0
      %s195 = scalar_select %p194, %s20, 0
      %s196 = smul.addr %s195, 8
      %s197 = scalar_lea.vmem %s1, %s196
      %p198 = pneg %p85
      %p199 = pneg %p82
      %p200 = pneg %p106
      %p201 = pneg %p103
      %p202 = pneg %p136
      %p203 = pneg %p133
      %s204 = smul.u32 %s22, %s21
      %s205 = smul.u32 4, %s204
      %p206 = scmp.lt.s32.totalorder %s20, 0
      %s207 = scalar_select %p206, %s20, 0
      %p208 = scmp.lt.s32.totalorder %s205, 3
      %s209 = scalar_select %p208, %s205, 3
      %s210 = smul.addr %s207, 4
      %s211 = sadd.s32 %s209, %s210
      %s212 = smul.addr %s211, 8
      %s213 = scalar_lea.vmem %s3, %s212
      %s214 = ssub.s32 1, %s21
      %s215 = smul.u32 %s22, %s214
      %s216 = smul.u32 4, %s215
      %p217 = scmp.lt.s32.totalorder %s216, 3
      %s218 = scalar_select %p217, %s216, 3
      %s219 = smul.addr %s218, 8
      %s220 = scalar_lea.vmem %s0, %s219
      %s221 = ssub.s32 1, %s21
      %s222 = smul.u32 %s22, %s221
      %s223 = smul.u32 4, %s222
      %p224 = scmp.lt.s32.totalorder %s20, 0
      %s225 = scalar_select %p224, %s20, 0
      %s226 = smul.addr %s225, 8
      %s227 = scalar_lea.vmem %s1, %s226
      %s228 = smul.u32 %s22, %s21
      %s229 = smul.u32 4, %s228
      %p230 = scmp.lt.s32.totalorder %s20, 0
      %s231 = scalar_select %p230, %s20, 0
      %p232 = scmp.lt.s32.totalorder %s229, 3
      %s233 = scalar_select %p232, %s229, 3
      %s234 = smul.addr %s231, 4
      %s235 = sadd.s32 %s233, %s234
      %s236 = smul.addr %s235, 8
      %s237 = scalar_lea.vmem %s3, %s236
      %s238 = smul.u32 %s22, %s21
      %s239 = smul.u32 4, %s238
      %p240 = scmp.eq.s32.totalorder %s21, 0
      // Predicated region
      $region33: #{conv_block.1} parent=31 // pred_check
        %p241 = pneg %p240
      $region34: #{conv_block.1} parent=31 // pred_check_branch
        %243 = sbr.rel (%p241) target = $region36
      $region35: #{conv_block.1} parent=31 // pred_region
        %p244 = scmp.eq.s32.totalorder %s22, 0
        // Predicated region
        $region37: #{conv_block.1} parent=35 // pred_check
          %p245 = pneg %p244
        $region38: #{conv_block.1} parent=35 // pred_check_branch
          %247 = sbr.rel (%p245) target = $region40
        $region39: #{conv_block.1} parent=35 // pred_region
          %vm248 = vcmask 7168
          %249 = vst.msk [vmem:[#allocation2] sm:$0xff] %vm248, 0.0
          %250 = vst.msk [vmem:[#allocation3] sm:$0xff] %vm248, 0.0
        $region40: #{conv_block.1} parent=35 // pred_fallthru
          _
        %v251 = vld [vmem:[%s227] sm:$0xff]
        %v252 = vld [vmem:[%s220] sm:$0xff]
        %v253 = vld [vmem:[%s220 + $0x8] sm:$0xff]
        %v254 = vld [vmem:[%s220 + $0x10] sm:$0xff]
        %v255 = vld [vmem:[%s220 + $0x18] sm:$0xff]
        %v256 = vld [vmem:[%s220 + $0x20] sm:$0xff]
        %v257 = vld [vmem:[%s220 + $0x28] sm:$0xff]
        %v258 = vld [vmem:[%s220 + $0x30] sm:$0xff]
        %v259 = vld [vmem:[%s220 + $0x38] sm:$0xff]
        %v260 = vld [vmem:[%s220 + $0x40] sm:$0xff]
        %v261 = vld [vmem:[%s220 + $0x48] sm:$0xff]
        %v262 = vld [vmem:[%s220 + $0x50] sm:$0xff]
        %v263 = vld [vmem:[%s220 + $0x58] sm:$0xff]
        %v264 = vld [vmem:[%s220 + $0x60] sm:$0xff]
        %v265 = vld [vmem:[%s220 + $0x68] sm:$0xff]
        %v266 = vld [vmem:[%s220 + $0x70] sm:$0xff]
        %v267 = vld [vmem:[%s220 + $0x78] sm:$0xff]
        %v268 = vld [vmem:[%s220 + $0x80] sm:$0xf]
        %v269 = vld [vmem:[%s220 + $0x88] sm:$0xf]
        %v270 = vld [vmem:[%s220 + $0x90] sm:$0xf]
        %v271 = vld [vmem:[%s220 + $0x98] sm:$0xf]
        %vm272 = vcmask 293888
        %v274 = vsel %vm272, %v251, 0
        %vm276 = vcmask 1043456
        %v278 = vsel %vm276, %v268, 0
        %v281 = vsel %vm276, %v269, 0
        %v284 = vsel %vm276, %v270, 0
        %v287 = vsel %vm276, %v271, 0
        %289 = vmatprep.subr.mxu0 %v253
        %290 = vmatpush1.msra.mxu0 %v252
        %291 = vmatprep.subr.mxu0 %v257
        %292 = vmatpush1.msra.mxu0 %v256
        %293 = vmatprep.subr.mxu0 %v261
        %294 = vmatpush1.msra.mxu0 %v260
        %295 = vmatprep.subr.mxu0 %v265
        %296 = vmatpush1.msra.mxu0 %v264
        %297 = vmatprep.subr.mxu0 %v281
        %298 = vmatpush1.msra.mxu0 %v278
        %299 = vmatprep.subr.mxu0 0.0
        %300 = vmatpush1.msra.mxu0 0.0
        %301 = vmatprep.subr.mxu0 0.0
        %302 = vmatpush1.msra.mxu0 0.0
        %303 = vmatprep.subr.mxu0 0.0
        %304 = vmatpush1.msra.mxu0 0.0
        %305 = vmatprep.subr.mxu0 0.0
        %306 = vmatpush1.msra.mxu0 0.0
        %307 = vmatprep.subr.mxu0 0.0
        %308 = vmatpush1.msra.mxu0 0.0
        %309 = vmatprep.subr.mxu0 0.0
        %310 = vmatpush1.msra.mxu0 0.0
        %311 = vmatprep.subr.mxu0 0.0
        %312 = vmatpush1.msra.mxu0 0.0
        %313 = vmatprep.subr.mxu0 0.0
        %314 = vmatpush1.msra.mxu0 0.0
        %315 = vmatprep.subr.mxu0 0.0
        %316 = vmatpush1.msra.mxu0 0.0
        %317 = vmatprep.subr.mxu0 0.0
        %318 = vmatpush1.msra.mxu0 0.0
        %319 = vmatprep.subr.mxu0 0.0
        %320 = vmatpush1.msra.mxu0 0.0
        %321 = vmatprep.subr.mxu0 0.0
        %322 = vmatpush1.msra.mxu0 0.0
        %323 = vmatprep.subr.mxu0 0.0
        %324 = vmatpush1.msra.mxu0 0.0
        %325 = vmatprep.subr.mxu0 0.0
        %326 = vmatpush1.msra.mxu0 0.0
        %327 = vmatprep.subr.mxu0 0.0
        %328 = vmatpush1.msra.mxu0 0.0
        %329 = vmatprep.subr.mxu0 0.0
        %330 = vmatpush1.msra.mxu0 0.0
        %331 = vmatprep.subr.mxu0 0.0
        %332 = vmatpush1.msra.mxu0 0.0
        %333 = vmatprep.subr.mxu0 0.0
        %334 = vmatpush1.msra.mxu0 0.0
        %335 = vmatprep.subr.mxu0 0.0
        %336 = vmatpush1.msra.mxu0 0.0
        %337 = vmatprep.subr.mxu0 0.0
        %338 = vmatpush1.msra.mxu0 0.0
        %339 = vmatprep.subr.mxu0 0.0
        %340 = vmatpush1.msra.mxu0 0.0
        %341 = vmatprep.subr.mxu0 0.0
        %342 = vmatpush1.msra.mxu0 0.0
        %343 = vmatprep.subr.mxu0 0.0
        %344 = vmatpush1.msra.mxu0 0.0
        %345 = vmatprep.subr.mxu0 0.0
        %346 = vmatpush1.msra.mxu0 0.0
        %347 = vmatprep.subr.mxu0 0.0
        %348 = vmatpush1.msra.mxu0 0.0
        %349 = vmatprep.subr.mxu0 0.0
        %350 = vmatpush1.msra.mxu0 0.0
        %351 = vmatprep.subr.mxu0 0.0
        %352 = vmatpush1.msra.mxu0 0.0
        %353 = vmatprep.mubr.f32.mxu0 0.0
        %354 = vmatmul.mubr.f32.gmra.mrb[0].mxu0 %v274
        %v355 = vpop.f32.mrb[0].mxu0
        %v356 = vadd.f32 0.0, %v355
        %v357 = vpop.f32.mrb[0].mxu0
        %v358 = vadd.f32 0.0, %v357
        %359 = vdwg.mxu0
        %360 = vmatprep.subr.mxu0 %v255
        %361 = vmatpush1.msra.mxu0 %v254
        %362 = vmatprep.subr.mxu0 %v259
        %363 = vmatpush1.msra.mxu0 %v258
        %364 = vmatprep.subr.mxu0 %v263
        %365 = vmatpush1.msra.mxu0 %v262
        %366 = vmatprep.subr.mxu0 %v267
        %367 = vmatpush1.msra.mxu0 %v266
        %368 = vmatprep.subr.mxu0 %v287
        %369 = vmatpush1.msra.mxu0 %v284
        %370 = vmatprep.subr.mxu0 0.0
        %371 = vmatpush1.msra.mxu0 0.0
        %372 = vmatprep.subr.mxu0 0.0
        %373 = vmatpush1.msra.mxu0 0.0
        %374 = vmatprep.subr.mxu0 0.0
        %375 = vmatpush1.msra.mxu0 0.0
        %376 = vmatprep.subr.mxu0 0.0
        %377 = vmatpush1.msra.mxu0 0.0
        %378 = vmatprep.subr.mxu0 0.0
        %379 = vmatpush1.msra.mxu0 0.0
        %380 = vmatprep.subr.mxu0 0.0
        %381 = vmatpush1.msra.mxu0 0.0
        %382 = vmatprep.subr.mxu0 0.0
        %383 = vmatpush1.msra.mxu0 0.0
        %384 = vmatprep.subr.mxu0 0.0
        %385 = vmatpush1.msra.mxu0 0.0
        %386 = vmatprep.subr.mxu0 0.0
        %387 = vmatpush1.msra.mxu0 0.0
        %388 = vmatprep.subr.mxu0 0.0
        %389 = vmatpush1.msra.mxu0 0.0
        %390 = vmatprep.subr.mxu0 0.0
        %391 = vmatpush1.msra.mxu0 0.0
        %392 = vmatprep.subr.mxu0 0.0
        %393 = vmatpush1.msra.mxu0 0.0
        %394 = vmatprep.subr.mxu0 0.0
        %395 = vmatpush1.msra.mxu0 0.0
        %396 = vmatprep.subr.mxu0 0.0
        %397 = vmatpush1.msra.mxu0 0.0
        %398 = vmatprep.subr.mxu0 0.0
        %399 = vmatpush1.msra.mxu0 0.0
        %400 = vmatprep.subr.mxu0 0.0
        %401 = vmatpush1.msra.mxu0 0.0
        %402 = vmatprep.subr.mxu0 0.0
        %403 = vmatpush1.msra.mxu0 0.0
        %404 = vmatprep.subr.mxu0 0.0
        %405 = vmatpush1.msra.mxu0 0.0
        %406 = vmatprep.subr.mxu0 0.0
        %407 = vmatpush1.msra.mxu0 0.0
        %408 = vmatprep.subr.mxu0 0.0
        %409 = vmatpush1.msra.mxu0 0.0
        %410 = vmatprep.subr.mxu0 0.0
        %411 = vmatpush1.msra.mxu0 0.0
        %412 = vmatprep.subr.mxu0 0.0
        %413 = vmatpush1.msra.mxu0 0.0
        %414 = vmatprep.subr.mxu0 0.0
        %415 = vmatpush1.msra.mxu0 0.0
        %416 = vmatprep.subr.mxu0 0.0
        %417 = vmatpush1.msra.mxu0 0.0
        %418 = vmatprep.subr.mxu0 0.0
        %419 = vmatpush1.msra.mxu0 0.0
        %420 = vmatprep.subr.mxu0 0.0
        %421 = vmatpush1.msra.mxu0 0.0
        %422 = vmatprep.subr.mxu0 0.0
        %423 = vmatpush1.msra.mxu0 0.0
        %424 = vmatprep.mubr.f32.mxu0 0.0
        %425 = vmatmul.mubr.f32.gmra.mrb[0].mxu0 %v274
        %v426 = vpop.f32.mrb[0].mxu0
        %v427 = vadd.f32 0.0, %v426
        %v428 = vpop.f32.mrb[0].mxu0
        %v429 = vadd.f32 0.0, %v428
        %430 = vdwg.mxu0
        %s431 = smul.u32 %s22, 4
        %s432 = smul.addr %s431, 8
        %s433 = scalar_lea.vmem [#allocation6], %s432
        %434 = vst [vmem:[%s433] sm:$0xff] %v356
        %435 = vst [vmem:[%s433 + $0x8] sm:$0xff] %v358
        %436 = vst [vmem:[%s433 + $0x10] sm:$0xff] %v427
        %437 = vst [vmem:[%s433 + $0x18] sm:$0xff] %v429
        %v438 = vld [vmem:[#allocation2] sm:$0xff]
        %v439 = vadd.f32 %v356, %v358
        %v440 = vadd.f32 %v439, %v427
        %v441 = vadd.f32 %v440, %v429
        %442 = vadd.xlane.f32.xlu0 %v441
        %v443 = vpop.xlane.xlu0 %442
        %v444 = vadd.f32 %v438, %v443
        %vm445 = vcmask 7168
        %446 = vst.msk [vmem:[#allocation2] sm:$0xff] %vm445, %v444
        %v447 = vld [vmem:[#allocation3] sm:$0xff]
        %v448 = vmul.f32 %v356, %v356
        %v449 = vmul.f32 %v358, %v358
        %v450 = vmul.f32 %v427, %v427
        %v451 = vmul.f32 %v429, %v429
        %v452 = vadd.f32 %v448, %v449
        %v453 = vadd.f32 %v452, %v450
        %v454 = vadd.f32 %v453, %v451
        %455 = vadd.xlane.f32.xlu0 %v454
        %v456 = vpop.xlane.xlu0 %455
        %v457 = vadd.f32 %v447, %v456
        %458 = vst.msk [vmem:[#allocation3] sm:$0xff] %vm445, %v457
      $region36: #{conv_block.1} parent=31 // pred_fallthru
        _
      %p459 = scmp.eq.s32.totalorder %s21, 1
      // Predicated region
      $region41: #{conv_block.1} parent=31 // pred_check
        %p460 = pneg %p459
      $region42: #{conv_block.1} parent=31 // pred_check_branch
        %462 = sbr.rel (%p460) target = $region44
      $region43: #{conv_block.1} parent=31 // pred_region
        %p463 = scmp.eq.s32.totalorder %s22, 0
        // Predicated region
        $region45: #{conv_block.1} parent=43 // pred_check
          %p464 = pneg %p463
        $region46: #{conv_block.1} parent=43 // pred_check_branch
          %466 = sbr.rel (%p464) target = $region48
        $region47: #{conv_block.1} parent=43 // pred_region
          %v467 = vld [vmem:[#allocation2] sm:$0xff]
          %v468 = vmul.f32 %v467, 0.001953125
          %v469 = vld [vmem:[#allocation3] sm:$0xff]
          %v470 = vmul.f32 %v469, 0.001953125
          %v471 = vmul.f32 %v468, %v468
          %v472 = vsub.f32 %v470, %v471
          %v473 = vadd.f32 %v472, 1e-05
          %v474 = vrsqrt.pop %v473
          %vm475 = vcmask 7168
          %476 = vst.msk [vmem:[#allocation4] sm:$0xff] %vm475, %v474
          %477 = vst.msk [vmem:[#allocation5] sm:$0xff] %vm475, %v468
        $region48: #{conv_block.1} parent=43 // pred_fallthru
          _
        %s478 = smul.u32 %s22, 4
        %s479 = smul.addr %s478, 8
        %s480 = scalar_lea.vmem [#allocation6], %s479
        %v481 = vld [vmem:[%s480] sm:$0xff]
        %v482 = vld [vmem:[%s480 + $0x8] sm:$0xff]
        %v483 = vld [vmem:[%s480 + $0x10] sm:$0xff]
        %v484 = vld [vmem:[%s480 + $0x18] sm:$0xff]
        %v485 = vld [vmem:[#allocation5] sm:$0xff]
        %487 = vset.pattern.permute.xlu0 0
        %488 = vperm.xlu0 %487, %v485
        %v489 = vpop.permute.xlu0 %488
        %v491 = vsub.f32 %v481, %v489
        %v492 = vsub.f32 %v482, %v489
        %v493 = vsub.f32 %v483, %v489
        %v494 = vsub.f32 %v484, %v489
        %v495 = vld [vmem:[#allocation4] sm:$0xff]
        %497 = vset.pattern.permute.xlu0 0
        %498 = vperm.xlu0 %497, %v495
        %v499 = vpop.permute.xlu0 %498
        %v501 = vmul.f32 %v491, %v499
        %v502 = vmul.f32 %v492, %v499
        %v503 = vmul.f32 %v493, %v499
        %v504 = vmul.f32 %v494, %v499
        %s505 = sld [smem:[#allocation7]]
        %vm506 = vcmp.gt.f32.partialorder %v501, 0.0
        %vm507 = vcmp.gt.f32.partialorder %v502, 0.0
        %vm508 = vcmp.gt.f32.partialorder %v503, 0.0
        %vm509 = vcmp.gt.f32.partialorder %v504, 0.0
        %v510 = vstv %s505
        %v511 = vmul.f32 %v510, %v501
        %v512 = vmul.f32 %v510, %v502
        %v513 = vmul.f32 %v510, %v503
        %v514 = vmul.f32 %v510, %v504
        %v515 = vsel %vm506, %v501, %v511
        %v516 = vsel %vm507, %v502, %v512
        %v517 = vsel %vm508, %v503, %v513
        %v518 = vsel %vm509, %v504, %v514
        %519 = vst [vmem:[%s237] sm:$0xff] %v515
        %520 = vst [vmem:[%s237 + $0x8] sm:$0xff] %v516
        %521 = vst [vmem:[%s237 + $0x10] sm:$0xff] %v517
        %522 = vst [vmem:[%s237 + $0x18] sm:$0xff] %v518
      $region44: #{conv_block.1} parent=31 // pred_fallthru
        _
      %s523 = smul.u32 %s22, %s21
      %s524 = smul.u32 4, %s523
      %p525 = scmp.lt.s32.totalorder %s20, 0
      %s526 = scalar_select %p525, %s20, 0
      %p527 = scmp.lt.s32.totalorder %s524, 3
      %s528 = scalar_select %p527, %s524, 3
      %s529 = smul.addr %s526, 4
      %s530 = sadd.s32 %s528, %s529
      %s531 = smul.addr %s530, 8
      %s532 = scalar_lea.vmem %s3, %s531
      // Predicated region
      $region49: #{conv_block.1} parent=31 // pred_check
        %p533 = pneg %p133
      $region50: #{conv_block.1} parent=31 // pred_check_branch
        %535 = sbr.rel (%p533) target = $region52
      $region51: #{conv_block.1} parent=31 // pred_region
        %s536 = smul.u32 %s22, %s21
        %s537 = smul.u32 4, %s536
      $region52: #{conv_block.1} parent=31 // pred_fallthru
        _
    $region32: #{conv_block.1} parent=5 // pred_fallthru
      _
    %p538 = scmp.le.s32.totalorder 2, %s10
    // Predicated region
    $region53: #{conv_block.1} parent=5 // pred_check
      %p539 = pneg %p538
    $region54: #{conv_block.1} parent=5 // pred_check_branch
      %541 = sbr.rel (%p539) target = $region56
    $region55: #{conv_block.1} parent=5 // pred_region
      %s542 = ssub.s32 %s10, 2
      // Predicated region
      $region57: #{conv_block.1} parent=55 // pred_check
        %p543 = pneg %p139
      $region58: #{conv_block.1} parent=55 // pred_check_branch
        %545 = sbr.rel (%p543) target = $region60
      $region59: #{conv_block.1} parent=55 // pred_region
        %s546 = smul.u32 %s25, %s24
        %s547 = smul.u32 4, %s546
        %p548 = scmp.lt.s32.totalorder %s23, 0
        %s549 = scalar_select %p548, %s23, 0
        %p550 = scmp.lt.s32.totalorder %s547, 3
        %s551 = scalar_select %p550, %s547, 3
        %s552 = smul.addr %s549, 4
        %s553 = sadd.s32 %s551, %s552
        %s554 = smul.addr %s553, 8
        %s555 = scalar_lea.vmem %s3, %s554
      $region60: #{conv_block.1} parent=55 // pred_fallthru
        _
    $region56: #{conv_block.1} parent=5 // pred_fallthru
      _
  $region6: #{conv_block.1} parent=0 // loop_footer
    %s14 = sadd.s32 1, %s10
  $region7: #{conv_block.1} parent=0 // loop_footer_branch
    %9 = sbr.rel target = $region3
  $region8: #{conv_block.1} parent=0 // loop_exit
    _

</llo_original>
